<compile_context>
chip_gen: v7x
topology: tpu7x:2x2x1
jax: 0.10.0
libtpu: 0.0.40
codegen_flags: <defaults>
</compile_context>

<pallas_src>
import jax
import jax.numpy as jnp
from jax.experimental import pallas as pl
from jax.experimental.pallas import tpu as pltpu


def _batch_map(i):           # activations / logits: step i -> batch tile i
    return (0, i)


def _resident_map(i):        # constant block index: weights stay VMEM-resident
    return (0, 0)


def _round_up(v, m):
    return ((v + m - 1) // m) * m


def _pick_batch_tile(B, max_tile=4096):
    """Lane-friendly batch tile: multiple of 256 (MXU-friendly on v6e/v7x, still a
    128-multiple for v5e), minimizing padded batch, preferring >=2 grid steps (v7x
    megacore) and then the largest tile (fewer grid steps ~0.35us each)."""
    B128 = _round_up(B, 128)
    if B128 <= 256:
        return B128                       # one small lane-valid tile
    candidates = range(256, max(max_tile, 256) + 1, 256)

    def score(tb):
        pad = _round_up(B128, tb)
        steps = pad // tb
        return (pad, 0 if steps >= 2 else 1, -tb)

    return min(candidates, key=score)


def _mlp_kernel(x_ref,
                w1_ref, b1_ref,
                w2_ref, b2_ref,
                w3_ref, b3_ref,
                w4_ref, b4_ref,
                w5_ref, b5_ref,
                out_ref):
    x = x_ref[...].astype(jnp.float32)            # (C_in, TB), lane-dense
    c_in = x_ref.shape[0]

    # Layer 1 (Conv1d k=1, C_in -> 16). K = C_in is tiny (2), so keep it on the VPU:
    # statically-unrolled lane-dense broadcast-FMAs over the (16, TB) tile.
    w1 = w1_ref[...]                              # (16, C_in) f32, tiny
    acc = w1[:, 0:1] * x[0:1, :]
    for k in range(1, c_in):
        acc = acc + w1[:, k:k + 1] * x[k:k + 1, :]
    h = jnp.maximum(acc + b1_ref[...], 0.0)       # (16, TB)

    def dense(w_ref, h_f32, b_ref):
        # bf16 weights (pre-cast in wrapper) x bf16 activations on the MXU with f32
        # accumulation; bias-add / ReLU remain f32 (v5e has no bf16 VPU). N = TB fills
        # the MXU columns in this (features, batch) layout.
        return jnp.dot(w_ref[...], h_f32.astype(jnp.bfloat16),
                       preferred_element_type=jnp.float32) + b_ref[...]

    h = jnp.maximum(dense(w2_ref, h, b2_ref), 0.0)   # 16 -> 32
    h = jnp.maximum(dense(w3_ref, h, b3_ref), 0.0)   # 32 -> 64
    # flatten([B, 64, 1]) == [B, 64] -> classifier head
    h = jnp.maximum(dense(w4_ref, h, b4_ref), 0.0)   # 64 -> 32
    # Dropout(p=0.2): identity in eval/inference mode.
    logits = dense(w5_ref, h, b5_ref)                # 32 -> num_classes
    out_ref[...] = logits.astype(out_ref.dtype)      # (num_classes, TB), lane-dense


def cnn_classifier_1d_forward(x, params, *, max_batch_tile=4096):
    """x: [B, input_channels]; params: weights [F_out, F_in], biases [F_out, 1]."""
    B, C_in = x.shape
    num_classes = params["w5"].shape[0]

    TB = _pick_batch_tile(B, max_batch_tile)
    B_pad = _round_up(B, TB)

    # (features, batch) layout: batch on the 128-lane axis, one contiguous x DMA/tile.
    x_t = jnp.transpose(x).astype(jnp.float32)       # (C_in, B)
    if B_pad != B:
        x_t = jnp.pad(x_t, ((0, 0), (0, B_pad - B)))

    # Pre-cast MXU-layer weights to bf16 (no per-step converts, half the weight VMEM).
    args = (x_t,
            params["w1"].astype(jnp.float32), params["b1"].astype(jnp.float32),
            params["w2"].astype(jnp.bfloat16), params["b2"].astype(jnp.float32),
            params["w3"].astype(jnp.bfloat16), params["b3"].astype(jnp.float32),
            params["w4"].astype(jnp.bfloat16), params["b4"].astype(jnp.float32),
            params["w5"].astype(jnp.bfloat16), params["b5"].astype(jnp.float32))

    in_specs = [pl.BlockSpec((C_in, TB), _batch_map)]
    for a in args[1:]:
        in_specs.append(pl.BlockSpec(a.shape, _resident_map))
    out_spec = pl.BlockSpec((num_classes, TB), _batch_map)

    flops = 2 * B_pad * (C_in * 16 + 16 * 32 + 32 * 64 + 64 * 32 + 32 * num_classes)
    weight_bytes = sum(int(a.size) * a.dtype.itemsize for a in args[1:])
    bytes_accessed = 4 * (B_pad * C_in + B_pad * num_classes) + weight_bytes

    out = pl.pallas_call(
        _mlp_kernel,
        out_shape=jax.ShapeDtypeStruct((num_classes, B_pad), jnp.float32),
        grid=(B_pad // TB,),
        in_specs=in_specs,
        out_specs=out_spec,
        compiler_params=pltpu.CompilerParams(
            dimension_semantics=("parallel",)),   # v7x: shard batch tiles over 2 TCs
        cost_estimate=pl.CostEstimate(flops=flops, transcendentals=0,
                                      bytes_accessed=bytes_accessed),
    )(*args)

    logits = jnp.transpose(out)                      # (B_pad, num_classes)
    return logits[:B] if B_pad != B else logits


def init_params(key, input_channels, num_classes):
    """Deterministic parameter init. Weights stored as [F_out, F_in] (PyTorch layout),
    biases as [F_out, 1] so they broadcast over the lane (batch) axis in-kernel."""
    dims = [(16, input_channels),   # conv_block1 (kernel_size=1 conv == linear)
            (32, 16),               # conv_block2
            (64, 32),               # conv_block3
            (32, 64),               # classifier_head Linear(64, 32)
            (num_classes, 32)]      # classifier_head Linear(32, num_classes)
    params = {}
    for i, (fout, fin) in enumerate(dims, start=1):
        key, kw, kb = jax.random.split(key, 3)
        bound = 1.0 / jnp.sqrt(jnp.float32(fin))    # PyTorch-style uniform bound
        params[f"w{i}"] = jax.random.uniform(kw, (fout, fin), jnp.float32,
                                             minval=-bound, maxval=bound)
        params[f"b{i}"] = jax.random.uniform(kb, (fout, 1), jnp.float32,
                                             minval=-bound, maxval=bound)
    return params


def reference_forward(x, params):
    """Plain-JAX reference mirroring the kernel's math (f32 layer 1 on the VPU path,
    bf16-input / f32-accumulate MXU for layers 2-5)."""
    def dense(w, h, b):
        return jnp.dot(w.astype(jnp.bfloat16), h.astype(jnp.bfloat16),
                       preferred_element_type=jnp.float32) + b

    xt = jnp.transpose(x).astype(jnp.float32)        # (C_in, B)
    h = jnp.maximum(
        jnp.einsum("oc,cb->ob", params["w1"], xt,
                   precision=jax.lax.Precision.HIGHEST) + params["b1"], 0.0)
    h = jnp.maximum(dense(params["w2"], h, params["b2"]), 0.0)
    h = jnp.maximum(dense(params["w3"], h, params["b3"]), 0.0)
    h = jnp.maximum(dense(params["w4"], h, params["b4"]), 0.0)
    logits = dense(params["w5"], h, params["b5"])
    return jnp.transpose(logits)


if __name__ == "__main__":
    key = jax.random.PRNGKey(0)
    key, kx, kp = jax.random.split(key, 3)

    batch = 8
    input_channels = 2   # forward() docstring: x has shape [batch_size, 2]
    num_classes = 10

    x = jax.random.normal(kx, (batch, input_channels), jnp.float32)
    params = init_params(kp, input_channels, num_classes)

    logits = cnn_classifier_1d_forward(x, params)
    logits = jax.block_until_ready(logits)

    ref = reference_forward(x, params)
    assert logits.shape == (batch, num_classes)
    assert jnp.allclose(logits, ref, atol=1e-3, rtol=1e-3)

    print("KERNEL_OK")
</pallas_src>

<mosaic_0001>
module attributes {stable_mosaic.version = 11 : i64} {
  func.func @_mlp_kernel(%arg0: i32, %arg1: memref<2x128xf32, #tpu.memory_space<vmem>>, %arg2: memref<16x2xf32, #tpu.memory_space<vmem>>, %arg3: memref<16x1xf32, #tpu.memory_space<vmem>>, %arg4: memref<32x16xbf16, #tpu.memory_space<vmem>>, %arg5: memref<32x1xf32, #tpu.memory_space<vmem>>, %arg6: memref<64x32xbf16, #tpu.memory_space<vmem>>, %arg7: memref<64x1xf32, #tpu.memory_space<vmem>>, %arg8: memref<32x64xbf16, #tpu.memory_space<vmem>>, %arg9: memref<32x1xf32, #tpu.memory_space<vmem>>, %arg10: memref<10x32xbf16, #tpu.memory_space<vmem>>, %arg11: memref<10x1xf32, #tpu.memory_space<vmem>>, %arg12: memref<10x128xf32, #tpu.memory_space<vmem>>) attributes {dimension_semantics = [#tpu.dimension_semantics<parallel>], iteration_bounds = array<i64: 1>, scalar_prefetch = 0 : i64, scratch_operands = 0 : i64, tpu.core_type = #tpu.core_type<tc>, window_params = [{transform_indices = @transform_0, window_bounds = array<i64: 2, 128>}, {pipeline_mode = #tpu.pipeline_mode<synchronous>, transform_indices = @transform_1, window_bounds = array<i64: 16, 2>}, {pipeline_mode = #tpu.pipeline_mode<synchronous>, transform_indices = @transform_2, window_bounds = array<i64: 16, 1>}, {pipeline_mode = #tpu.pipeline_mode<synchronous>, transform_indices = @transform_3, window_bounds = array<i64: 32, 16>}, {pipeline_mode = #tpu.pipeline_mode<synchronous>, transform_indices = @transform_4, window_bounds = array<i64: 32, 1>}, {pipeline_mode = #tpu.pipeline_mode<synchronous>, transform_indices = @transform_5, window_bounds = array<i64: 64, 32>}, {pipeline_mode = #tpu.pipeline_mode<synchronous>, transform_indices = @transform_6, window_bounds = array<i64: 64, 1>}, {pipeline_mode = #tpu.pipeline_mode<synchronous>, transform_indices = @transform_7, window_bounds = array<i64: 32, 64>}, {pipeline_mode = #tpu.pipeline_mode<synchronous>, transform_indices = @transform_8, window_bounds = array<i64: 32, 1>}, {pipeline_mode = #tpu.pipeline_mode<synchronous>, transform_indices = @transform_9, window_bounds = array<i64: 10, 32>}, {pipeline_mode = #tpu.pipeline_mode<synchronous>, transform_indices = @transform_10, window_bounds = array<i64: 10, 1>}, {transform_indices = @transform_11, window_bounds = array<i64: 10, 128>}]} {
    %c0 = arith.constant 0 : index
    %c0_0 = arith.constant 0 : index
    %0 = vector.load %arg1[%c0, %c0_0] : memref<2x128xf32, #tpu.memory_space<vmem>>, vector<2x128xf32>
    %c0_1 = arith.constant 0 : index
    %c0_2 = arith.constant 0 : index
    %1 = vector.load %arg2[%c0_1, %c0_2] : memref<16x2xf32, #tpu.memory_space<vmem>>, vector<16x2xf32>
    %2 = vector.extract_strided_slice %1 {offsets = [0, 0], sizes = [16, 1], strides = [1, 1]} : vector<16x2xf32> to vector<16x1xf32>
    %3 = vector.extract_strided_slice %0 {offsets = [0, 0], sizes = [1, 128], strides = [1, 1]} : vector<2x128xf32> to vector<1x128xf32>
    %4 = vector.broadcast %2 : vector<16x1xf32> to vector<16x128xf32>
    %5 = vector.broadcast %3 : vector<1x128xf32> to vector<16x128xf32>
    %6 = arith.mulf %4, %5 : vector<16x128xf32>
    %7 = vector.extract_strided_slice %1 {offsets = [0, 1], sizes = [16, 1], strides = [1, 1]} : vector<16x2xf32> to vector<16x1xf32>
    %8 = vector.extract_strided_slice %0 {offsets = [1, 0], sizes = [1, 128], strides = [1, 1]} : vector<2x128xf32> to vector<1x128xf32>
    %9 = vector.broadcast %7 : vector<16x1xf32> to vector<16x128xf32>
    %10 = vector.broadcast %8 : vector<1x128xf32> to vector<16x128xf32>
    %11 = arith.mulf %9, %10 : vector<16x128xf32>
    %12 = arith.addf %6, %11 : vector<16x128xf32>
    %c0_3 = arith.constant 0 : index
    %c0_4 = arith.constant 0 : index
    %13 = vector.load %arg3[%c0_3, %c0_4] : memref<16x1xf32, #tpu.memory_space<vmem>>, vector<16x1xf32>
    %14 = vector.broadcast %13 : vector<16x1xf32> to vector<16x128xf32>
    %15 = arith.addf %12, %14 : vector<16x128xf32>
    %cst = arith.constant 0.000000e+00 : f32
    %16 = vector.broadcast %cst : f32 to vector<16x128xf32>
    %17 = arith.maximumf %15, %16 : vector<16x128xf32>
    %c0_5 = arith.constant 0 : index
    %c0_6 = arith.constant 0 : index
    %18 = vector.load %arg4[%c0_5, %c0_6] : memref<32x16xbf16, #tpu.memory_space<vmem>>, vector<32x16xbf16>
    %19 = arith.truncf %17 : vector<16x128xf32> to vector<16x128xbf16>
    %cst_7 = arith.constant dense<0.000000e+00> : vector<32x128xf32>
    %20 = tpu.matmul %18, %19, %cst_7 {dimension_numbers = #tpu.dot_dimension_numbers<[1], [0], [0], [1], [0, 0, 1, 1], [], []>} : vector<32x16xbf16>, vector<16x128xbf16>, vector<32x128xf32> -> vector<32x128xf32>
    %c0_8 = arith.constant 0 : index
    %c0_9 = arith.constant 0 : index
    %21 = vector.load %arg5[%c0_8, %c0_9] : memref<32x1xf32, #tpu.memory_space<vmem>>, vector<32x1xf32>
    %22 = vector.broadcast %21 : vector<32x1xf32> to vector<32x128xf32>
    %23 = arith.addf %20, %22 : vector<32x128xf32>
    %cst_10 = arith.constant 0.000000e+00 : f32
    %24 = vector.broadcast %cst_10 : f32 to vector<32x128xf32>
    %25 = arith.maximumf %23, %24 : vector<32x128xf32>
    %c0_11 = arith.constant 0 : index
    %c0_12 = arith.constant 0 : index
    %26 = vector.load %arg6[%c0_11, %c0_12] : memref<64x32xbf16, #tpu.memory_space<vmem>>, vector<64x32xbf16>
    %27 = arith.truncf %25 : vector<32x128xf32> to vector<32x128xbf16>
    %cst_13 = arith.constant dense<0.000000e+00> : vector<64x128xf32>
    %28 = tpu.matmul %26, %27, %cst_13 {dimension_numbers = #tpu.dot_dimension_numbers<[1], [0], [0], [1], [0, 0, 1, 1], [], []>} : vector<64x32xbf16>, vector<32x128xbf16>, vector<64x128xf32> -> vector<64x128xf32>
    %c0_14 = arith.constant 0 : index
    %c0_15 = arith.constant 0 : index
    %29 = vector.load %arg7[%c0_14, %c0_15] : memref<64x1xf32, #tpu.memory_space<vmem>>, vector<64x1xf32>
    %30 = vector.broadcast %29 : vector<64x1xf32> to vector<64x128xf32>
    %31 = arith.addf %28, %30 : vector<64x128xf32>
    %cst_16 = arith.constant 0.000000e+00 : f32
    %32 = vector.broadcast %cst_16 : f32 to vector<64x128xf32>
    %33 = arith.maximumf %31, %32 : vector<64x128xf32>
    %c0_17 = arith.constant 0 : index
    %c0_18 = arith.constant 0 : index
    %34 = vector.load %arg8[%c0_17, %c0_18] : memref<32x64xbf16, #tpu.memory_space<vmem>>, vector<32x64xbf16>
    %35 = arith.truncf %33 : vector<64x128xf32> to vector<64x128xbf16>
    %cst_19 = arith.constant dense<0.000000e+00> : vector<32x128xf32>
    %36 = tpu.matmul %34, %35, %cst_19 {dimension_numbers = #tpu.dot_dimension_numbers<[1], [0], [0], [1], [0, 0, 1, 1], [], []>} : vector<32x64xbf16>, vector<64x128xbf16>, vector<32x128xf32> -> vector<32x128xf32>
    %c0_20 = arith.constant 0 : index
    %c0_21 = arith.constant 0 : index
    %37 = vector.load %arg9[%c0_20, %c0_21] : memref<32x1xf32, #tpu.memory_space<vmem>>, vector<32x1xf32>
    %38 = vector.broadcast %37 : vector<32x1xf32> to vector<32x128xf32>
    %39 = arith.addf %36, %38 : vector<32x128xf32>
    %cst_22 = arith.constant 0.000000e+00 : f32
    %40 = vector.broadcast %cst_22 : f32 to vector<32x128xf32>
    %41 = arith.maximumf %39, %40 : vector<32x128xf32>
    %c0_23 = arith.constant 0 : index
    %c0_24 = arith.constant 0 : index
    %42 = vector.load %arg10[%c0_23, %c0_24] : memref<10x32xbf16, #tpu.memory_space<vmem>>, vector<10x32xbf16>
    %43 = arith.truncf %41 : vector<32x128xf32> to vector<32x128xbf16>
    %cst_25 = arith.constant dense<0.000000e+00> : vector<10x128xf32>
    %44 = tpu.matmul %42, %43, %cst_25 {dimension_numbers = #tpu.dot_dimension_numbers<[1], [0], [0], [1], [0, 0, 1, 1], [], []>} : vector<10x32xbf16>, vector<32x128xbf16>, vector<10x128xf32> -> vector<10x128xf32>
    %c0_26 = arith.constant 0 : index
    %c0_27 = arith.constant 0 : index
    %45 = vector.load %arg11[%c0_26, %c0_27] : memref<10x1xf32, #tpu.memory_space<vmem>>, vector<10x1xf32>
    %46 = vector.broadcast %45 : vector<10x1xf32> to vector<10x128xf32>
    %47 = arith.addf %44, %46 : vector<10x128xf32>
    %c0_28 = arith.constant 0 : index
    %c0_29 = arith.constant 0 : index
    %48 = vector.load %arg12[%c0_28, %c0_29] : memref<10x128xf32, #tpu.memory_space<vmem>>, vector<10x128xf32>
    tpu.vector_store %arg12[%c0_28, %c0_29], %47 {strides = array<i32>} : memref<10x128xf32, #tpu.memory_space<vmem>>, vector<10x128xf32>,
    return
  }
  func.func @transform_0(%arg0: i32) -> (i32, i32) {
    %c0_i32 = arith.constant 0 : i32
    %c0_i32_0 = arith.constant 0 : i32
    return %c0_i32, %arg0 : i32, i32
  }
  func.func @transform_1(%arg0: i32) -> (i32, i32) {
    %c0_i32 = arith.constant 0 : i32
    %c0_i32_0 = arith.constant 0 : i32
    %c0_i32_1 = arith.constant 0 : i32
    return %c0_i32, %c0_i32_0 : i32, i32
  }
  func.func @transform_2(%arg0: i32) -> (i32, i32) {
    %c0_i32 = arith.constant 0 : i32
    %c0_i32_0 = arith.constant 0 : i32
    %c0_i32_1 = arith.constant 0 : i32
    return %c0_i32, %c0_i32_0 : i32, i32
  }
  func.func @transform_3(%arg0: i32) -> (i32, i32) {
    %c0_i32 = arith.constant 0 : i32
    %c0_i32_0 = arith.constant 0 : i32
    %c0_i32_1 = arith.constant 0 : i32
    return %c0_i32, %c0_i32_0 : i32, i32
  }
  func.func @transform_4(%arg0: i32) -> (i32, i32) {
    %c0_i32 = arith.constant 0 : i32
    %c0_i32_0 = arith.constant 0 : i32
    %c0_i32_1 = arith.constant 0 : i32
    return %c0_i32, %c0_i32_0 : i32, i32
  }
  func.func @transform_5(%arg0: i32) -> (i32, i32) {
    %c0_i32 = arith.constant 0 : i32
    %c0_i32_0 = arith.constant 0 : i32
    %c0_i32_1 = arith.constant 0 : i32
    return %c0_i32, %c0_i32_0 : i32, i32
  }
  func.func @transform_6(%arg0: i32) -> (i32, i32) {
    %c0_i32 = arith.constant 0 : i32
    %c0_i32_0 = arith.constant 0 : i32
    %c0_i32_1 = arith.constant 0 : i32
    return %c0_i32, %c0_i32_0 : i32, i32
  }
  func.func @transform_7(%arg0: i32) -> (i32, i32) {
    %c0_i32 = arith.constant 0 : i32
    %c0_i32_0 = arith.constant 0 : i32
    %c0_i32_1 = arith.constant 0 : i32
    return %c0_i32, %c0_i32_0 : i32, i32
  }
  func.func @transform_8(%arg0: i32) -> (i32, i32) {
    %c0_i32 = arith.constant 0 : i32
    %c0_i32_0 = arith.constant 0 : i32
    %c0_i32_1 = arith.constant 0 : i32
    return %c0_i32, %c0_i32_0 : i32, i32
  }
  func.func @transform_9(%arg0: i32) -> (i32, i32) {
    %c0_i32 = arith.constant 0 : i32
    %c0_i32_0 = arith.constant 0 : i32
    %c0_i32_1 = arith.constant 0 : i32
    return %c0_i32, %c0_i32_0 : i32, i32
  }
  func.func @transform_10(%arg0: i32) -> (i32, i32) {
    %c0_i32 = arith.constant 0 : i32
    %c0_i32_0 = arith.constant 0 : i32
    %c0_i32_1 = arith.constant 0 : i32
    return %c0_i32, %c0_i32_0 : i32, i32
  }
  func.func @transform_11(%arg0: i32) -> (i32, i32) {
    %c0_i32 = arith.constant 0 : i32
    %c0_i32_0 = arith.constant 0 : i32
    return %c0_i32, %arg0 : i32, i32
  }
}

</mosaic_0001>

<llo_original>
// kernel: tpu_custom_call.1
$region0: #{tpu_custom_call.1}
  #allocation0 [shape = 'u32[]', space=smem, size = 0x4, offset = 0x4, fixed_abs, tag = 'smem constant byte address 0x4 - core index']
  #allocation1 [shape = 'u32[144,128]{1,0:T(1,128)}', space=vmem, size = 0x12000, scoped, tag = 'internal scratch']
  %s0 = inlined_call_operand.vmem [shape: f32[2,128], index: 0, kind: input, shape index: {}]
  %s1 = inlined_call_operand.vmem [shape: f32[16,2], index: 1, kind: input, shape index: {}]
  %s2 = inlined_call_operand.vmem [shape: f32[16,1], index: 2, kind: input, shape index: {}]
  %s3 = inlined_call_operand.vmem [shape: bf16[32,16], index: 3, kind: input, shape index: {}]
  %s4 = inlined_call_operand.vmem [shape: f32[32,1], index: 4, kind: input, shape index: {}]
  %s5 = inlined_call_operand.vmem [shape: bf16[64,32], index: 5, kind: input, shape index: {}]
  %s6 = inlined_call_operand.vmem [shape: f32[64,1], index: 6, kind: input, shape index: {}]
  %s7 = inlined_call_operand.vmem [shape: bf16[32,64], index: 7, kind: input, shape index: {}]
  %s8 = inlined_call_operand.vmem [shape: f32[32,1], index: 8, kind: input, shape index: {}]
  %s9 = inlined_call_operand.vmem [shape: bf16[10,32], index: 9, kind: input, shape index: {}]
  %s10 = inlined_call_operand.vmem [shape: f32[10,1], index: 10, kind: input, shape index: {}]
  %s11 = inlined_call_operand.hbm [shape: f32[10,128], index: 11, kind: output, shape index: {}]
  %s12 = sld [smem:[#allocation0]]
  $region54: #{tpu_custom_call.1} parent=0
    _
  %s14 = ssub.s32 1, %s12
  %s15 = scalar_select 0, %s14, %s12
  $region1: #{tpu_custom_call.1} parent=0
    #allocation2 [shape = 'u8[8192]{0}', space=vmem, size = 0x2000, scoped, tag = 'output window, operand 0, single buffered']
    #allocation3 [shape = 's32[1]{0}', space=sflag, size = 0x4, scoped, tag = 'scoped memory for tpu_custom_call.1']
    %16 = vsyncpa [#allocation3], 0
    // Predicated region
    $region2: #{tpu_custom_call.1} parent=1 // pred_check
      _
    $region3: #{tpu_custom_call.1} parent=1 // pred_check_branch
      %18 = sbr.rel (0) target = $region5
    $region4: #{tpu_custom_call.1} parent=1 // pred_region
      _
    $region5: #{tpu_custom_call.1} parent=1 // pred_fallthru
      _
    // Predicated region
    $region6: #{tpu_custom_call.1} parent=1 // pred_check
      _
    $region7: #{tpu_custom_call.1} parent=1 // pred_check_branch
      %20 = sbr.rel (0) target = $region9
    $region8: #{tpu_custom_call.1} parent=1 // pred_region
      _
    $region9: #{tpu_custom_call.1} parent=1 // pred_fallthru
      _
    // Predicated region
    $region10: #{tpu_custom_call.1} parent=1 // pred_check
      _
    $region11: #{tpu_custom_call.1} parent=1 // pred_check_branch
      %22 = sbr.rel (0) target = $region13
    $region12: #{tpu_custom_call.1} parent=1 // pred_region
      _
    $region13: #{tpu_custom_call.1} parent=1 // pred_fallthru
      _
    // Predicated region
    $region14: #{tpu_custom_call.1} parent=1 // pred_check
      _
    $region15: #{tpu_custom_call.1} parent=1 // pred_check_branch
      %24 = sbr.rel (0) target = $region17
    $region16: #{tpu_custom_call.1} parent=1 // pred_region
      _
    $region17: #{tpu_custom_call.1} parent=1 // pred_fallthru
      _
    // Predicated region
    $region18: #{tpu_custom_call.1} parent=1 // pred_check
      _
    $region19: #{tpu_custom_call.1} parent=1 // pred_check_branch
      %26 = sbr.rel (0) target = $region21
    $region20: #{tpu_custom_call.1} parent=1 // pred_region
      _
    $region21: #{tpu_custom_call.1} parent=1 // pred_fallthru
      _
    // Predicated region
    $region22: #{tpu_custom_call.1} parent=1 // pred_check
      _
    $region23: #{tpu_custom_call.1} parent=1 // pred_check_branch
      %28 = sbr.rel (0) target = $region25
    $region24: #{tpu_custom_call.1} parent=1 // pred_region
      _
    $region25: #{tpu_custom_call.1} parent=1 // pred_fallthru
      _
    // Predicated region
    $region26: #{tpu_custom_call.1} parent=1 // pred_check
      _
    $region27: #{tpu_custom_call.1} parent=1 // pred_check_branch
      %30 = sbr.rel (0) target = $region29
    $region28: #{tpu_custom_call.1} parent=1 // pred_region
      _
    $region29: #{tpu_custom_call.1} parent=1 // pred_fallthru
      _
    // Predicated region
    $region30: #{tpu_custom_call.1} parent=1 // pred_check
      _
    $region31: #{tpu_custom_call.1} parent=1 // pred_check_branch
      %32 = sbr.rel (0) target = $region33
    $region32: #{tpu_custom_call.1} parent=1 // pred_region
      _
    $region33: #{tpu_custom_call.1} parent=1 // pred_fallthru
      _
    // Predicated region
    $region34: #{tpu_custom_call.1} parent=1 // pred_check
      _
    $region35: #{tpu_custom_call.1} parent=1 // pred_check_branch
      %34 = sbr.rel (0) target = $region37
    $region36: #{tpu_custom_call.1} parent=1 // pred_region
      _
    $region37: #{tpu_custom_call.1} parent=1 // pred_fallthru
      _
    // Predicated region
    $region38: #{tpu_custom_call.1} parent=1 // pred_check
      _
    $region39: #{tpu_custom_call.1} parent=1 // pred_check_branch
      %36 = sbr.rel (0) target = $region41
    $region40: #{tpu_custom_call.1} parent=1 // pred_region
      _
    $region41: #{tpu_custom_call.1} parent=1 // pred_fallthru
      _
    // Predicated region
    $region42: #{tpu_custom_call.1} parent=1 // pred_check
      _
    $region43: #{tpu_custom_call.1} parent=1 // pred_check_branch
      %38 = sbr.rel (0) target = $region45
    $region44: #{tpu_custom_call.1} parent=1 // pred_region
      _
    $region45: #{tpu_custom_call.1} parent=1 // pred_fallthru
      _
    %v40 = vld [vmem:[%s0] sm:$0x3]
    %v41 = vld [vmem:[%s1] sm:$0xff]
    %v42 = vld [vmem:[%s1 + $0x8] sm:$0xff]
    %44 = vset.pattern.permute.xlu0 0
    %45 = vperm.xlu0 %44, %v41
    %v46 = vpop.permute.xlu0 %45
    %49 = vset.pattern.permute.xlu0 0
    %50 = vperm.xlu0 %49, %v42
    %v51 = vpop.permute.xlu0 %50
    %v53 = vlaneseq
    %v54 = vshrl.u32 %v53, 7
    %v55 = vsub.s32 0, %v54
    %v56 = vrot.slane %v40, %v55
    %v57 = vmul.f32 %v46, %v56
    %v58 = vmul.f32 %v51, %v56
    %59 = vset.pattern.permute.xlu0 1
    %60 = vperm.xlu0 %59, %v41
    %v61 = vpop.permute.xlu0 %60
    %63 = vset.pattern.permute.xlu0 1
    %64 = vperm.xlu0 %63, %v42
    %v65 = vpop.permute.xlu0 %64
    %v67 = vlaneseq
    %v68 = vshrl.u32 %v67, 7
    %v69 = vsub.s32 1, %v68
    %v70 = vrot.slane %v40, %v69
    %v71 = vmul.f32 %v61, %v70
    %v72 = vmul.f32 %v65, %v70
    %v73 = vadd.f32 %v57, %v71
    %v74 = vadd.f32 %v58, %v72
    %v75 = vld [vmem:[%s2] sm:$0xff]
    %v76 = vld [vmem:[%s2 + $0x8] sm:$0xff]
    %78 = vset.pattern.permute.xlu0 0
    %79 = vperm.xlu0 %78, %v75
    %v80 = vpop.permute.xlu0 %79
    %83 = vset.pattern.permute.xlu0 0
    %84 = vperm.xlu0 %83, %v76
    %v85 = vpop.permute.xlu0 %84
    %v87 = vadd.f32 %v73, %v80
    %v88 = vadd.f32 %v74, %v85
    %v89 = vmax.f32 %v87, 0.0
    %v90 = vmax.f32 %v88, 0.0
    %v91 = vld [vmem:[%s3] sm:$0xf]
    %v92 = vld [vmem:[%s3 + $0x4] sm:$0xf]
    %v93 = vld [vmem:[%s3 + $0x8] sm:$0xf]
    %v94 = vld [vmem:[%s3 + $0xc] sm:$0xf]
    %v95 = vpack.c.bf16 %v90, %v89
    %v96 = vld [vmem:[%s4] sm:$0xff]
    %v97 = vld [vmem:[%s4 + $0x8] sm:$0xff]
    %v98 = vld [vmem:[%s4 + $0x10] sm:$0xff]
    %v99 = vld [vmem:[%s4 + $0x18] sm:$0xff]
    %101 = vset.pattern.permute.xlu0 0
    %102 = vperm.xlu0 %101, %v96
    %v103 = vpop.permute.xlu0 %102
    %106 = vset.pattern.permute.xlu0 0
    %107 = vperm.xlu0 %106, %v97
    %v108 = vpop.permute.xlu0 %107
    %111 = vset.pattern.permute.xlu0 0
    %112 = vperm.xlu0 %111, %v98
    %v113 = vpop.permute.xlu0 %112
    %116 = vset.pattern.permute.xlu0 0
    %117 = vperm.xlu0 %116, %v99
    %v118 = vpop.permute.xlu0 %117
    %v124 = vunpack.c.l.b16 %v91
    %v125 = vunpack.c.l.b16 %v92
    %v126 = vunpack.c.l.b16 %v93
    %v127 = vunpack.c.l.b16 %v94
    %v128 = vpack.c.b16 %v125, %v124
    %v129 = vpack.c.b16 %v127, %v126
    %vm130 = vcmask 130048
    %v132 = vsel %vm130, %v128, 0
    %v135 = vsel %vm130, %v129, 0
    %137 = vmatprep.subr.bf16.mxu0 0
    %138 = vmatpush1.bf16.msra.mxu0 %v95
    %139 = vmatprep.subr.bf16.mxu0 0
    %140 = vmatpush1.bf16.msra.mxu0 0
    %141 = vmatprep.subr.bf16.mxu0 0
    %142 = vmatpush1.bf16.msra.mxu0 0
    %143 = vmatprep.subr.bf16.mxu0 0
    %144 = vmatpush1.bf16.msra.mxu0 0
    %145 = vmatprep.subr.bf16.mxu0 0
    %146 = vmatpush1.bf16.msra.mxu0 0
    %147 = vmatprep.subr.bf16.mxu0 0
    %148 = vmatpush1.bf16.msra.mxu0 0
    %149 = vmatprep.subr.bf16.mxu0 0
    %150 = vmatpush1.bf16.msra.mxu0 0
    %151 = vmatprep.subr.bf16.mxu0 0
    %152 = vmatpush1.bf16.msra.mxu0 0
    %153 = vmatprep.subr.bf16.mxu0 0
    %154 = vmatpush1.bf16.msra.mxu0 0
    %155 = vmatprep.subr.bf16.mxu0 0
    %156 = vmatpush1.bf16.msra.mxu0 0
    %157 = vmatprep.subr.bf16.mxu0 0
    %158 = vmatpush1.bf16.msra.mxu0 0
    %159 = vmatprep.subr.bf16.mxu0 0
    %160 = vmatpush1.bf16.msra.mxu0 0
    %161 = vmatprep.subr.bf16.mxu0 0
    %162 = vmatpush1.bf16.msra.mxu0 0
    %163 = vmatprep.subr.bf16.mxu0 0
    %164 = vmatpush1.bf16.msra.mxu0 0
    %165 = vmatprep.subr.bf16.mxu0 0
    %166 = vmatpush1.bf16.msra.mxu0 0
    %167 = vmatprep.subr.bf16.mxu0 0
    %168 = vmatpush1.bf16.msra.mxu0 0
    %169 = vmatprep.mubr.bf16.mxu0 0
    %170 = vmatmul.mubr.bf16.gmra.mrb[0].mxu0 %v132
    %v171 = vpop.f32.mrb[0].mxu0
    %v172 = vadd.f32 %v103, %v171
    %v173 = vpop.f32.mrb[0].mxu0
    %v174 = vpop.f32.mrb[0].mxu0
    %v175 = vadd.f32 %v108, %v174
    %v176 = vpop.f32.mrb[0].mxu0
    %177 = vmatprep.mubr.bf16.mxu0 0
    %178 = vmatmul.mubr.bf16.gmra.mrb[0].mxu0 %v135
    %v179 = vpop.f32.mrb[0].mxu0
    %v180 = vadd.f32 %v113, %v179
    %v181 = vpop.f32.mrb[0].mxu0
    %v182 = vpop.f32.mrb[0].mxu0
    %v183 = vadd.f32 %v118, %v182
    %v184 = vpop.f32.mrb[0].mxu0
    %185 = vdwg.mxu0
    %v186 = vmax.f32 %v172, 0.0
    %v187 = vmax.f32 %v175, 0.0
    %v188 = vmax.f32 %v180, 0.0
    %v189 = vmax.f32 %v183, 0.0
    %v190 = vld [vmem:[%s5] sm:$0xf]
    %v191 = vld [vmem:[%s5 + $0x4] sm:$0xf]
    %v192 = vld [vmem:[%s5 + $0x8] sm:$0xf]
    %v193 = vld [vmem:[%s5 + $0xc] sm:$0xf]
    %v194 = vld [vmem:[%s5 + $0x10] sm:$0xf]
    %v195 = vld [vmem:[%s5 + $0x14] sm:$0xf]
    %v196 = vld [vmem:[%s5 + $0x18] sm:$0xf]
    %v197 = vld [vmem:[%s5 + $0x1c] sm:$0xf]
    %v198 = vpack.c.bf16 %v187, %v186
    %v199 = vpack.c.bf16 %v189, %v188
    %v200 = vld [vmem:[%s6] sm:$0xff]
    %v201 = vld [vmem:[%s6 + $0x8] sm:$0xff]
    %v202 = vld [vmem:[%s6 + $0x10] sm:$0xff]
    %v203 = vld [vmem:[%s6 + $0x18] sm:$0xff]
    %v204 = vld [vmem:[%s6 + $0x20] sm:$0xff]
    %v205 = vld [vmem:[%s6 + $0x28] sm:$0xff]
    %v206 = vld [vmem:[%s6 + $0x30] sm:$0xff]
    %v207 = vld [vmem:[%s6 + $0x38] sm:$0xff]
    %209 = vset.pattern.permute.xlu0 0
    %210 = vperm.xlu0 %209, %v200
    %v211 = vpop.permute.xlu0 %210
    %214 = vset.pattern.permute.xlu0 0
    %215 = vperm.xlu0 %214, %v201
    %v216 = vpop.permute.xlu0 %215
    %219 = vset.pattern.permute.xlu0 0
    %220 = vperm.xlu0 %219, %v202
    %v221 = vpop.permute.xlu0 %220
    %224 = vset.pattern.permute.xlu0 0
    %225 = vperm.xlu0 %224, %v203
    %v226 = vpop.permute.xlu0 %225
    %229 = vset.pattern.permute.xlu0 0
    %230 = vperm.xlu0 %229, %v204
    %v231 = vpop.permute.xlu0 %230
    %234 = vset.pattern.permute.xlu0 0
    %235 = vperm.xlu0 %234, %v205
    %v236 = vpop.permute.xlu0 %235
    %239 = vset.pattern.permute.xlu0 0
    %240 = vperm.xlu0 %239, %v206
    %v241 = vpop.permute.xlu0 %240
    %244 = vset.pattern.permute.xlu0 0
    %245 = vperm.xlu0 %244, %v207
    %v246 = vpop.permute.xlu0 %245
    %v256 = vunpack.c.l.b16 %v190
    %v257 = vunpack.c.l.b16 %v191
    %v258 = vunpack.c.l.b16 %v192
    %v259 = vunpack.c.l.b16 %v193
    %v260 = vunpack.c.l.b16 %v194
    %v261 = vunpack.c.l.b16 %v195
    %v262 = vunpack.c.l.b16 %v196
    %v263 = vunpack.c.l.b16 %v197
    %v264 = vpack.c.b16 %v257, %v256
    %v265 = vpack.c.b16 %v259, %v258
    %v266 = vpack.c.b16 %v261, %v260
    %v267 = vpack.c.b16 %v263, %v262
    %vm268 = vcmask 261120
    %v270 = vsel %vm268, %v264, 0
    %v273 = vsel %vm268, %v265, 0
    %v276 = vsel %vm268, %v266, 0
    %v279 = vsel %vm268, %v267, 0
    %281 = vmatprep.subr.bf16.mxu0 0
    %282 = vmatpush1.bf16.msra.mxu0 %v198
    %283 = vmatprep.subr.bf16.mxu0 0
    %284 = vmatpush1.bf16.msra.mxu0 %v199
    %285 = vmatprep.subr.bf16.mxu0 0
    %286 = vmatpush1.bf16.msra.mxu0 0
    %287 = vmatprep.subr.bf16.mxu0 0
    %288 = vmatpush1.bf16.msra.mxu0 0
    %289 = vmatprep.subr.bf16.mxu0 0
    %290 = vmatpush1.bf16.msra.mxu0 0
    %291 = vmatprep.subr.bf16.mxu0 0
    %292 = vmatpush1.bf16.msra.mxu0 0
    %293 = vmatprep.subr.bf16.mxu0 0
    %294 = vmatpush1.bf16.msra.mxu0 0
    %295 = vmatprep.subr.bf16.mxu0 0
    %296 = vmatpush1.bf16.msra.mxu0 0
    %297 = vmatprep.subr.bf16.mxu0 0
    %298 = vmatpush1.bf16.msra.mxu0 0
    %299 = vmatprep.subr.bf16.mxu0 0
    %300 = vmatpush1.bf16.msra.mxu0 0
    %301 = vmatprep.subr.bf16.mxu0 0
    %302 = vmatpush1.bf16.msra.mxu0 0
    %303 = vmatprep.subr.bf16.mxu0 0
    %304 = vmatpush1.bf16.msra.mxu0 0
    %305 = vmatprep.subr.bf16.mxu0 0
    %306 = vmatpush1.bf16.msra.mxu0 0
    %307 = vmatprep.subr.bf16.mxu0 0
    %308 = vmatpush1.bf16.msra.mxu0 0
    %309 = vmatprep.subr.bf16.mxu0 0
    %310 = vmatpush1.bf16.msra.mxu0 0
    %311 = vmatprep.subr.bf16.mxu0 0
    %312 = vmatpush1.bf16.msra.mxu0 0
    %313 = vmatprep.mubr.bf16.mxu0 0
    %314 = vmatmul.mubr.bf16.gmra.mrb[0].mxu0 %v270
    %v315 = vpop.f32.mrb[0].mxu0
    %v316 = vadd.f32 %v211, %v315
    %v317 = vpop.f32.mrb[0].mxu0
    %v318 = vpop.f32.mrb[0].mxu0
    %v319 = vadd.f32 %v216, %v318
    %v320 = vpop.f32.mrb[0].mxu0
    %321 = vmatprep.mubr.bf16.mxu0 0
    %322 = vmatmul.mubr.bf16.gmra.mrb[0].mxu0 %v273
    %v323 = vpop.f32.mrb[0].mxu0
    %v324 = vadd.f32 %v221, %v323
    %v325 = vpop.f32.mrb[0].mxu0
    %v326 = vpop.f32.mrb[0].mxu0
    %v327 = vadd.f32 %v226, %v326
    %v328 = vpop.f32.mrb[0].mxu0
    %329 = vmatprep.mubr.bf16.mxu0 0
    %330 = vmatmul.mubr.bf16.gmra.mrb[0].mxu0 %v276
    %v331 = vpop.f32.mrb[0].mxu0
    %v332 = vadd.f32 %v231, %v331
    %v333 = vpop.f32.mrb[0].mxu0
    %v334 = vpop.f32.mrb[0].mxu0
    %v335 = vadd.f32 %v236, %v334
    %v336 = vpop.f32.mrb[0].mxu0
    %337 = vmatprep.mubr.bf16.mxu0 0
    %338 = vmatmul.mubr.bf16.gmra.mrb[0].mxu0 %v279
    %v339 = vpop.f32.mrb[0].mxu0
    %v340 = vadd.f32 %v241, %v339
    %v341 = vpop.f32.mrb[0].mxu0
    %v342 = vpop.f32.mrb[0].mxu0
    %v343 = vadd.f32 %v246, %v342
    %v344 = vpop.f32.mrb[0].mxu0
    %345 = vdwg.mxu0
    %v346 = vmax.f32 %v316, 0.0
    %v347 = vmax.f32 %v319, 0.0
    %v348 = vmax.f32 %v324, 0.0
    %v349 = vmax.f32 %v327, 0.0
    %v350 = vmax.f32 %v332, 0.0
    %v351 = vmax.f32 %v335, 0.0
    %v352 = vmax.f32 %v340, 0.0
    %v353 = vmax.f32 %v343, 0.0
    %v354 = vld [vmem:[%s7] sm:$0xf]
    %v355 = vld [vmem:[%s7 + $0x4] sm:$0xf]
    %v356 = vld [vmem:[%s7 + $0x8] sm:$0xf]
    %v357 = vld [vmem:[%s7 + $0xc] sm:$0xf]
    %v358 = vpack.c.bf16 %v347, %v346
    %v359 = vpack.c.bf16 %v349, %v348
    %v360 = vpack.c.bf16 %v351, %v350
    %v361 = vpack.c.bf16 %v353, %v352
    %v362 = vld [vmem:[%s8] sm:$0xff]
    %v363 = vld [vmem:[%s8 + $0x8] sm:$0xff]
    %v364 = vld [vmem:[%s8 + $0x10] sm:$0xff]
    %v365 = vld [vmem:[%s8 + $0x18] sm:$0xff]
    %367 = vset.pattern.permute.xlu0 0
    %368 = vperm.xlu0 %367, %v362
    %v369 = vpop.permute.xlu0 %368
    %372 = vset.pattern.permute.xlu0 0
    %373 = vperm.xlu0 %372, %v363
    %v374 = vpop.permute.xlu0 %373
    %377 = vset.pattern.permute.xlu0 0
    %378 = vperm.xlu0 %377, %v364
    %v379 = vpop.permute.xlu0 %378
    %382 = vset.pattern.permute.xlu0 0
    %383 = vperm.xlu0 %382, %v365
    %v384 = vpop.permute.xlu0 %383
    %v390 = vunpack.c.l.b16 %v354
    %v391 = vunpack.c.l.b16 %v355
    %v392 = vunpack.c.l.b16 %v356
    %v393 = vunpack.c.l.b16 %v357
    %v394 = vpack.c.b16 %v391, %v390
    %v395 = vpack.c.b16 %v393, %v392
    %vm396 = vcmask 523264
    %v398 = vsel %vm396, %v394, 0
    %v401 = vsel %vm396, %v395, 0
    %403 = vmatprep.subr.bf16.mxu0 0
    %404 = vmatpush1.bf16.msra.mxu0 %v358
    %405 = vmatprep.subr.bf16.mxu0 0
    %406 = vmatpush1.bf16.msra.mxu0 %v359
    %407 = vmatprep.subr.bf16.mxu0 0
    %408 = vmatpush1.bf16.msra.mxu0 %v360
    %409 = vmatprep.subr.bf16.mxu0 0
    %410 = vmatpush1.bf16.msra.mxu0 %v361
    %411 = vmatprep.subr.bf16.mxu0 0
    %412 = vmatpush1.bf16.msra.mxu0 0
    %413 = vmatprep.subr.bf16.mxu0 0
    %414 = vmatpush1.bf16.msra.mxu0 0
    %415 = vmatprep.subr.bf16.mxu0 0
    %416 = vmatpush1.bf16.msra.mxu0 0
    %417 = vmatprep.subr.bf16.mxu0 0
    %418 = vmatpush1.bf16.msra.mxu0 0
    %419 = vmatprep.subr.bf16.mxu0 0
    %420 = vmatpush1.bf16.msra.mxu0 0
    %421 = vmatprep.subr.bf16.mxu0 0
    %422 = vmatpush1.bf16.msra.mxu0 0
    %423 = vmatprep.subr.bf16.mxu0 0
    %424 = vmatpush1.bf16.msra.mxu0 0
    %425 = vmatprep.subr.bf16.mxu0 0
    %426 = vmatpush1.bf16.msra.mxu0 0
    %427 = vmatprep.subr.bf16.mxu0 0
    %428 = vmatpush1.bf16.msra.mxu0 0
    %429 = vmatprep.subr.bf16.mxu0 0
    %430 = vmatpush1.bf16.msra.mxu0 0
    %431 = vmatprep.subr.bf16.mxu0 0
    %432 = vmatpush1.bf16.msra.mxu0 0
    %433 = vmatprep.subr.bf16.mxu0 0
    %434 = vmatpush1.bf16.msra.mxu0 0
    %435 = vmatprep.mubr.bf16.mxu0 0
    %436 = vmatmul.mubr.bf16.gmra.mrb[0].mxu0 %v398
    %v437 = vpop.f32.mrb[0].mxu0
    %v438 = vadd.f32 %v369, %v437
    %v439 = vpop.f32.mrb[0].mxu0
    %v440 = vpop.f32.mrb[0].mxu0
    %v441 = vadd.f32 %v374, %v440
    %v442 = vpop.f32.mrb[0].mxu0
    %443 = vmatprep.mubr.bf16.mxu0 0
    %444 = vmatmul.mubr.bf16.gmra.mrb[0].mxu0 %v401
    %v445 = vpop.f32.mrb[0].mxu0
    %v446 = vadd.f32 %v379, %v445
    %v447 = vpop.f32.mrb[0].mxu0
    %v448 = vpop.f32.mrb[0].mxu0
    %v449 = vadd.f32 %v384, %v448
    %v450 = vpop.f32.mrb[0].mxu0
    %451 = vdwg.mxu0
    %v452 = vmax.f32 %v438, 0.0
    %v453 = vmax.f32 %v441, 0.0
    %v454 = vmax.f32 %v446, 0.0
    %v455 = vmax.f32 %v449, 0.0
    %v456 = vld [vmem:[%s9] sm:$0xf]
    %v457 = vld [vmem:[%s9 + $0x4] sm:$0x1]
    %v458 = vpack.c.bf16 %v453, %v452
    %v459 = vpack.c.bf16 %v455, %v454
    %v460 = vld [vmem:[%s10] sm:$0xff]
    %v461 = vld [vmem:[%s10 + $0x8] sm:$0x3]
    %463 = vset.pattern.permute.xlu0 0
    %464 = vperm.xlu0 %463, %v460
    %v465 = vpop.permute.xlu0 %464
    %468 = vset.pattern.permute.xlu0 0
    %469 = vperm.xlu0 %468, %v461
    %v470 = vpop.permute.xlu0 %469
    %v474 = vunpack.c.l.b16 %v456
    %v475 = vunpack.c.l.b16 %v457
    %v476 = vpack.c.b16 %v475, %v474
    %v478 = vsel %vm268, %v476, 0
    %480 = vmatprep.subr.bf16.mxu0 0
    %481 = vmatpush1.bf16.msra.mxu0 %v458
    %482 = vmatprep.subr.bf16.mxu0 0
    %483 = vmatpush1.bf16.msra.mxu0 %v459
    %484 = vmatprep.subr.bf16.mxu0 0
    %485 = vmatpush1.bf16.msra.mxu0 0
    %486 = vmatprep.subr.bf16.mxu0 0
    %487 = vmatpush1.bf16.msra.mxu0 0
    %488 = vmatprep.subr.bf16.mxu0 0
    %489 = vmatpush1.bf16.msra.mxu0 0
    %490 = vmatprep.subr.bf16.mxu0 0
    %491 = vmatpush1.bf16.msra.mxu0 0
    %492 = vmatprep.subr.bf16.mxu0 0
    %493 = vmatpush1.bf16.msra.mxu0 0
    %494 = vmatprep.subr.bf16.mxu0 0
    %495 = vmatpush1.bf16.msra.mxu0 0
    %496 = vmatprep.subr.bf16.mxu0 0
    %497 = vmatpush1.bf16.msra.mxu0 0
    %498 = vmatprep.subr.bf16.mxu0 0
    %499 = vmatpush1.bf16.msra.mxu0 0
    %500 = vmatprep.subr.bf16.mxu0 0
    %501 = vmatpush1.bf16.msra.mxu0 0
    %502 = vmatprep.subr.bf16.mxu0 0
    %503 = vmatpush1.bf16.msra.mxu0 0
    %504 = vmatprep.subr.bf16.mxu0 0
    %505 = vmatpush1.bf16.msra.mxu0 0
    %506 = vmatprep.subr.bf16.mxu0 0
    %507 = vmatpush1.bf16.msra.mxu0 0
    %508 = vmatprep.subr.bf16.mxu0 0
    %509 = vmatpush1.bf16.msra.mxu0 0
    %510 = vmatprep.subr.bf16.mxu0 0
    %511 = vmatpush1.bf16.msra.mxu0 0
    %512 = vmatprep.mubr.bf16.mxu0 0
    %513 = vmatmul.mubr.bf16.gmra.mrb[0].mxu0 %v478
    %v514 = vpop.f32.mrb[0].mxu0
    %v515 = vadd.f32 %v465, %v514
    %v516 = vpop.f32.mrb[0].mxu0
    %v517 = vpop.f32.mrb[0].mxu0
    %v518 = vadd.f32 %v470, %v517
    %v519 = vpop.f32.mrb[0].mxu0
    %520 = vdwg.mxu0
    %521 = vst [vmem:[#allocation2] sm:$0xff] %v515
    %522 = vst [vmem:[#allocation2 + $0x8] sm:$0x3] %v518
    // Predicated region
    $region46: #{tpu_custom_call.1} parent=1 // pred_check
      _
    $region47: #{tpu_custom_call.1} parent=1 // pred_check_branch
      %524 = sbr.rel (0) target = $region49
    $region48: #{tpu_custom_call.1} parent=1 // pred_region
      %s526 = ssub.s32 256, 256
      %527 = vsyncadd [#allocation3], %s526
      %s528 = sshll.u32 [#allocation2], 4
      %s529 = int_to_ptr.vmem [resolvable:$true] %s528
      %534 = dma.vmem_to_hbm [thread:$0]  %s529, 256, %s11, [#allocation3], 128, 128, 8
    $region49: #{tpu_custom_call.1} parent=1 // pred_fallthru
      _
    // Predicated region
    $region50: #{tpu_custom_call.1} parent=1 // pred_check
      _
    $region51: #{tpu_custom_call.1} parent=1 // pred_check_branch
      %536 = sbr.rel (0) target = $region53
    $region52: #{tpu_custom_call.1} parent=1 // pred_region
      %537 = dma.done [#allocation3], 256
    $region53: #{tpu_custom_call.1} parent=1 // pred_fallthru
      _
    %538 = vsyncpa [#allocation3], 1

</llo_original>
